<compile_context>
chip_gen: v7x
topology: tpu7x:2x2x1
jax: 0.10.0
libtpu: 0.0.40
codegen_flags: <defaults>
</compile_context>

<pallas_src>
import math

import jax
import jax.numpy as jnp
from jax.experimental import pallas as pl
from jax.experimental.pallas import tpu as pltpu


def mlp_kernel(x_ref, w1_ref, b1_ref, w2_ref, b2_ref, o_ref):
    # Load biases once (fp32).
    b1 = b1_ref[...]
    b2 = b2_ref[...]
    # First layer: (TILE_B, D) @ (D, H1) in bf16 operands, fp32 accumulate, +bias, ReLU.
    h = jnp.dot(x_ref[...], w1_ref[...], preferred_element_type=jnp.float32)
    h = jnp.maximum(h + b1, 0.0)
    # Second layer: cast the fp32 hidden activation back to bf16 for the MXU.
    y = jnp.dot(h.astype(w2_ref.dtype), w2_ref[...], preferred_element_type=jnp.float32)
    y = jnp.maximum(y + b2, 0.0)
    o_ref[...] = y.astype(o_ref.dtype)


def _round_up(n, m):
    return ((n + m - 1) // m) * m


def mlp_forward(x, w1, b1, w2, b2, *, tile_b=128, compute_dtype=jnp.bfloat16):
    """Fused MLP forward. x: (B, D) fp32; w1: (D, H1); b1: (H1,) or (1, H1); w2: (H1, H2); b2 likewise."""
    B, D = x.shape
    H1 = w1.shape[1]
    H2 = w2.shape[1]

    # Lane-dense / MXU-friendly padded sizes.
    D_p = _round_up(D, 128)
    H1_p = _round_up(H1, 128)
    H2_p = _round_up(H2, 128)
    B_p = _round_up(B, tile_b)

    # Zero-pad everything. Zeros are exact through matmul + relu, and the padded
    # rows/columns of the output are sliced off below.
    xp = jnp.zeros((B_p, D_p), compute_dtype).at[:B, :D].set(x.astype(compute_dtype))
    w1p = jnp.zeros((D_p, H1_p), compute_dtype).at[:D, :H1].set(w1.astype(compute_dtype))
    w2p = jnp.zeros((H1_p, H2_p), compute_dtype).at[:H1, :H2].set(w2.astype(compute_dtype))
    b1p = jnp.zeros((1, H1_p), jnp.float32).at[:, :H1].set(
        jnp.reshape(b1, (1, H1)).astype(jnp.float32))
    b2p = jnp.zeros((1, H2_p), jnp.float32).at[:, :H2].set(
        jnp.reshape(b2, (1, H2)).astype(jnp.float32))

    num_tiles = B_p // tile_b

    itemsize = lambda a: a.size * a.dtype.itemsize
    flops = 2 * B_p * (D_p * H1_p + H1_p * H2_p)
    bytes_accessed = (itemsize(xp) + itemsize(w1p) + itemsize(b1p)
                      + itemsize(w2p) + itemsize(b2p) + B_p * H2_p * 4)

    out_padded = pl.pallas_call(
        mlp_kernel,
        out_shape=jax.ShapeDtypeStruct((B_p, H2_p), jnp.float32),
        grid_spec=pltpu.PrefetchScalarGridSpec(
            num_scalar_prefetch=0,
            grid=(num_tiles,),
            in_specs=[
                # Activations: one batch tile per grid step (double-buffered by the pipeliner).
                pl.BlockSpec((tile_b, D_p), lambda i: (i, 0)),
                # Weights / biases: same block every step -> stay resident in VMEM.
                pl.BlockSpec((D_p, H1_p), lambda i: (0, 0)),
                pl.BlockSpec((1, H1_p), lambda i: (0, 0)),
                pl.BlockSpec((H1_p, H2_p), lambda i: (0, 0)),
                pl.BlockSpec((1, H2_p), lambda i: (0, 0)),
            ],
            out_specs=pl.BlockSpec((tile_b, H2_p), lambda i: (i, 0)),
        ),
        compiler_params=pltpu.CompilerParams(
            # Batch tiles are independent -> lets v7x shard them across both TensorCores.
            dimension_semantics=("parallel",),
        ),
        cost_estimate=pl.CostEstimate(
            flops=flops, transcendentals=0, bytes_accessed=bytes_accessed),
    )(xp, w1p, b1p, w2p, b2p)

    return out_padded[:B, :H2]


def kaiming_uniform(key, fan_in, fan_out):
    # PyTorch kaiming_uniform_ with nonlinearity='relu':
    #   gain = sqrt(2), bound = gain * sqrt(3 / fan_in)
    bound = math.sqrt(2.0) * math.sqrt(3.0 / fan_in)
    # Stored as (fan_in, fan_out) for the x @ W layout.
    return jax.random.uniform(
        key, (fan_in, fan_out), dtype=jnp.float32, minval=-bound, maxval=bound
    )


if __name__ == "__main__":
    # Module config: input_dim=32, layer_dims defaults to [64, 32]
    input_dim = 32
    layer_dims = [64, 32]
    batch = 8

    key = jax.random.PRNGKey(0)
    kx, kw1, kw2 = jax.random.split(key, 3)

    x = jax.random.normal(kx, (batch, input_dim), dtype=jnp.float32)

    w1 = kaiming_uniform(kw1, input_dim, layer_dims[0])
    b1 = jnp.zeros((layer_dims[0],), dtype=jnp.float32)  # init.zeros_
    w2 = kaiming_uniform(kw2, layer_dims[0], layer_dims[1])
    b2 = jnp.zeros((layer_dims[1],), dtype=jnp.float32)  # init.zeros_

    out = mlp_forward(x, w1, b1, w2, b2)
    out = jax.block_until_ready(out)
    assert out.shape == (batch, layer_dims[-1])

    # Reference 1: same bf16-operand / fp32-accumulate math in plain JAX (tight tolerance).
    xb, w1b, w2b = (a.astype(jnp.bfloat16) for a in (x, w1, w2))
    h_ref = jnp.maximum(
        jnp.dot(xb, w1b, preferred_element_type=jnp.float32) + b1[None, :], 0.0)
    ref_bf16 = jnp.maximum(
        jnp.dot(h_ref.astype(jnp.bfloat16), w2b, preferred_element_type=jnp.float32)
        + b2[None, :], 0.0)
    assert jnp.allclose(out, ref_bf16, atol=1e-3, rtol=1e-3)

    # Reference 2: pure fp32 PyTorch-equivalent forward (loose tolerance for bf16 operands).
    ref_fp32 = jnp.maximum(jnp.maximum(x @ w1 + b1[None, :], 0.0) @ w2 + b2[None, :], 0.0)
    assert jnp.allclose(out, ref_fp32, atol=5e-2, rtol=5e-2)

    print("KERNEL_OK")
</pallas_src>

<mosaic_0001>
module attributes {stable_mosaic.version = 11 : i64} {
  func.func @mlp_kernel(%arg0: i32, %arg1: memref<128x128xbf16, #tpu.memory_space<vmem>>, %arg2: memref<128x128xbf16, #tpu.memory_space<vmem>>, %arg3: memref<1x128xf32, #tpu.memory_space<vmem>>, %arg4: memref<128x128xbf16, #tpu.memory_space<vmem>>, %arg5: memref<1x128xf32, #tpu.memory_space<vmem>>, %arg6: memref<128x128xf32, #tpu.memory_space<vmem>>) attributes {dimension_semantics = [#tpu.dimension_semantics<parallel>], iteration_bounds = array<i64: 1>, scalar_prefetch = 0 : i64, scratch_operands = 0 : i64, tpu.core_type = #tpu.core_type<tc>, window_params = [{transform_indices = @transform_0, window_bounds = array<i64: 128, 128>}, {pipeline_mode = #tpu.pipeline_mode<synchronous>, transform_indices = @transform_1, window_bounds = array<i64: 128, 128>}, {pipeline_mode = #tpu.pipeline_mode<synchronous>, transform_indices = @transform_2, window_bounds = array<i64: 1, 128>}, {pipeline_mode = #tpu.pipeline_mode<synchronous>, transform_indices = @transform_3, window_bounds = array<i64: 128, 128>}, {pipeline_mode = #tpu.pipeline_mode<synchronous>, transform_indices = @transform_4, window_bounds = array<i64: 1, 128>}, {transform_indices = @transform_5, window_bounds = array<i64: 128, 128>}]} {
    %c0 = arith.constant 0 : index
    %c0_0 = arith.constant 0 : index
    %0 = vector.load %arg3[%c0, %c0_0] : memref<1x128xf32, #tpu.memory_space<vmem>>, vector<1x128xf32>
    %c0_1 = arith.constant 0 : index
    %c0_2 = arith.constant 0 : index
    %1 = vector.load %arg5[%c0_1, %c0_2] : memref<1x128xf32, #tpu.memory_space<vmem>>, vector<1x128xf32>
    %c0_3 = arith.constant 0 : index
    %c0_4 = arith.constant 0 : index
    %2 = vector.load %arg1[%c0_3, %c0_4] : memref<128x128xbf16, #tpu.memory_space<vmem>>, vector<128x128xbf16>
    %c0_5 = arith.constant 0 : index
    %c0_6 = arith.constant 0 : index
    %3 = vector.load %arg2[%c0_5, %c0_6] : memref<128x128xbf16, #tpu.memory_space<vmem>>, vector<128x128xbf16>
    %cst = arith.constant dense<0.000000e+00> : vector<128x128xf32>
    %4 = tpu.matmul %2, %3, %cst {dimension_numbers = #tpu.dot_dimension_numbers<[1], [0], [0], [1], [0, 0, 1, 1], [], []>} : vector<128x128xbf16>, vector<128x128xbf16>, vector<128x128xf32> -> vector<128x128xf32>
    %5 = vector.broadcast %0 : vector<1x128xf32> to vector<128x128xf32>
    %6 = arith.addf %4, %5 : vector<128x128xf32>
    %cst_7 = arith.constant 0.000000e+00 : f32
    %7 = vector.broadcast %cst_7 : f32 to vector<128x128xf32>
    %8 = arith.maximumf %6, %7 : vector<128x128xf32>
    %9 = arith.truncf %8 : vector<128x128xf32> to vector<128x128xbf16>
    %c0_8 = arith.constant 0 : index
    %c0_9 = arith.constant 0 : index
    %10 = vector.load %arg4[%c0_8, %c0_9] : memref<128x128xbf16, #tpu.memory_space<vmem>>, vector<128x128xbf16>
    %cst_10 = arith.constant dense<0.000000e+00> : vector<128x128xf32>
    %11 = tpu.matmul %9, %10, %cst_10 {dimension_numbers = #tpu.dot_dimension_numbers<[1], [0], [0], [1], [0, 0, 1, 1], [], []>} : vector<128x128xbf16>, vector<128x128xbf16>, vector<128x128xf32> -> vector<128x128xf32>
    %12 = vector.broadcast %1 : vector<1x128xf32> to vector<128x128xf32>
    %13 = arith.addf %11, %12 : vector<128x128xf32>
    %cst_11 = arith.constant 0.000000e+00 : f32
    %14 = vector.broadcast %cst_11 : f32 to vector<128x128xf32>
    %15 = arith.maximumf %13, %14 : vector<128x128xf32>
    %c0_12 = arith.constant 0 : index
    %c0_13 = arith.constant 0 : index
    %16 = vector.load %arg6[%c0_12, %c0_13] : memref<128x128xf32, #tpu.memory_space<vmem>>, vector<128x128xf32>
    tpu.vector_store %arg6[%c0_12, %c0_13], %15 {strides = array<i32>} : memref<128x128xf32, #tpu.memory_space<vmem>>, vector<128x128xf32>,
    return
  }
  func.func @transform_0(%arg0: i32) -> (i32, i32) {
    %c0_i32 = arith.constant 0 : i32
    %c0_i32_0 = arith.constant 0 : i32
    return %arg0, %c0_i32 : i32, i32
  }
  func.func @transform_1(%arg0: i32) -> (i32, i32) {
    %c0_i32 = arith.constant 0 : i32
    %c0_i32_0 = arith.constant 0 : i32
    %c0_i32_1 = arith.constant 0 : i32
    return %c0_i32, %c0_i32_0 : i32, i32
  }
  func.func @transform_2(%arg0: i32) -> (i32, i32) {
    %c0_i32 = arith.constant 0 : i32
    %c0_i32_0 = arith.constant 0 : i32
    %c0_i32_1 = arith.constant 0 : i32
    return %c0_i32, %c0_i32_0 : i32, i32
  }
  func.func @transform_3(%arg0: i32) -> (i32, i32) {
    %c0_i32 = arith.constant 0 : i32
    %c0_i32_0 = arith.constant 0 : i32
    %c0_i32_1 = arith.constant 0 : i32
    return %c0_i32, %c0_i32_0 : i32, i32
  }
  func.func @transform_4(%arg0: i32) -> (i32, i32) {
    %c0_i32 = arith.constant 0 : i32
    %c0_i32_0 = arith.constant 0 : i32
    %c0_i32_1 = arith.constant 0 : i32
    return %c0_i32, %c0_i32_0 : i32, i32
  }
  func.func @transform_5(%arg0: i32) -> (i32, i32) {
    %c0_i32 = arith.constant 0 : i32
    %c0_i32_0 = arith.constant 0 : i32
    return %arg0, %c0_i32 : i32, i32
  }
}

</mosaic_0001>

<llo_original>
// kernel: tpu_custom_call.1
$region0: #{tpu_custom_call.1}
  #allocation0 [shape = 'u32[]', space=smem, size = 0x4, offset = 0x4, fixed_abs, tag = 'smem constant byte address 0x4 - core index']
  #allocation1 [shape = 'u32[144,128]{1,0:T(1,128)}', space=vmem, size = 0x12000, scoped, tag = 'internal scratch']
  %s0 = inlined_call_operand.hbm [shape: bf16[128,128], index: 0, kind: input, shape index: {}]
  %s1 = inlined_call_operand.hbm [shape: bf16[128,128], index: 1, kind: input, shape index: {}]
  %s2 = inlined_call_operand.vmem [shape: f32[1,128], index: 2, kind: input, shape index: {}]
  %s3 = inlined_call_operand.hbm [shape: bf16[128,128], index: 3, kind: input, shape index: {}]
  %s4 = inlined_call_operand.vmem [shape: f32[1,128], index: 4, kind: input, shape index: {}]
  %s5 = inlined_call_operand.hbm [shape: f32[128,128], index: 5, kind: output, shape index: {}]
  %s6 = sld [smem:[#allocation0]]
  $region42: #{tpu_custom_call.1} parent=0
    _
  %s8 = ssub.s32 1, %s6
  %s9 = scalar_select 0, %s8, %s6
  $region1: #{tpu_custom_call.1} parent=0
    #allocation2 [shape = 'u8[32768]{0}', space=vmem, size = 0x8000, scoped, tag = 'input window, operand 0, single buffered']
    #allocation3 [shape = 's32[1]{0}', space=sflag, size = 0x4, scoped, tag = 'scoped memory for tpu_custom_call.1']
    #allocation4 [shape = 's32[1]{0}', space=sflag, size = 0x4, scoped, tag = 'scoped memory for tpu_custom_call.1']
    #allocation5 [shape = 'u8[32768]{0}', space=vmem, size = 0x8000, scoped, tag = 'input window, operand 1, single buffered']
    #allocation6 [shape = 's32[1]{0}', space=sflag, size = 0x4, scoped, tag = 'scoped memory for tpu_custom_call.1']
    #allocation7 [shape = 'u8[32768]{0}', space=vmem, size = 0x8000, scoped, tag = 'input window, operand 3, single buffered']
    #allocation8 [shape = 'u8[65536]{0}', space=vmem, size = 0x10000, scoped, tag = 'output window, operand 0, single buffered']
    %10 = vsyncpa [#allocation3], 0
    %11 = vsyncpa [#allocation6], 0
    %12 = vsyncpa [#allocation4], 0
    // Predicated region
    $region2: #{tpu_custom_call.1} parent=1 // pred_check
      _
    $region3: #{tpu_custom_call.1} parent=1 // pred_check_branch
      %14 = sbr.rel (0) target = $region5
    $region4: #{tpu_custom_call.1} parent=1 // pred_region
      %s16 = ssub.s32 1024, 1024
      %17 = vsyncadd [#allocation3], %s16
      %s18 = sshll.u32 [#allocation2], 4
      %s19 = int_to_ptr.vmem [resolvable:$true] %s18
      %24 = dma.hbm_to_vmem [thread:$0]  %s0, 1024, %s19, [#allocation3], 64, 64, 4
    $region5: #{tpu_custom_call.1} parent=1 // pred_fallthru
      _
    // Predicated region
    $region6: #{tpu_custom_call.1} parent=1 // pred_check
      _
    $region7: #{tpu_custom_call.1} parent=1 // pred_check_branch
      %26 = sbr.rel (0) target = $region9
    $region8: #{tpu_custom_call.1} parent=1 // pred_region
      %s28 = ssub.s32 1024, 1024
      %29 = vsyncadd [#allocation6], %s28
      %s30 = sshll.u32 [#allocation5], 4
      %s31 = int_to_ptr.vmem [resolvable:$true] %s30
      %36 = dma.hbm_to_vmem [thread:$0]  %s1, 1024, %s31, [#allocation6], 64, 64, 4
    $region9: #{tpu_custom_call.1} parent=1 // pred_fallthru
      _
    // Predicated region
    $region10: #{tpu_custom_call.1} parent=1 // pred_check
      _
    $region11: #{tpu_custom_call.1} parent=1 // pred_check_branch
      %38 = sbr.rel (0) target = $region13
    $region12: #{tpu_custom_call.1} parent=1 // pred_region
      _
    $region13: #{tpu_custom_call.1} parent=1 // pred_fallthru
      _
    // Predicated region
    $region14: #{tpu_custom_call.1} parent=1 // pred_check
      _
    $region15: #{tpu_custom_call.1} parent=1 // pred_check_branch
      %40 = sbr.rel (0) target = $region17
    $region16: #{tpu_custom_call.1} parent=1 // pred_region
      %s42 = ssub.s32 1024, 1024
      %43 = vsyncadd [#allocation6], %s42
      %s44 = sshll.u32 [#allocation7], 4
      %s45 = int_to_ptr.vmem [resolvable:$true] %s44
      %50 = dma.hbm_to_vmem [thread:$0]  %s3, 1024, %s45, [#allocation6], 64, 64, 4
    $region17: #{tpu_custom_call.1} parent=1 // pred_fallthru
      _
    // Predicated region
    $region18: #{tpu_custom_call.1} parent=1 // pred_check
      _
    $region19: #{tpu_custom_call.1} parent=1 // pred_check_branch
      %52 = sbr.rel (0) target = $region21
    $region20: #{tpu_custom_call.1} parent=1 // pred_region
      _
    $region21: #{tpu_custom_call.1} parent=1 // pred_fallthru
      _
    // Predicated region
    $region22: #{tpu_custom_call.1} parent=1 // pred_check
      _
    $region23: #{tpu_custom_call.1} parent=1 // pred_check_branch
      %54 = sbr.rel (0) target = $region25
    $region24: #{tpu_custom_call.1} parent=1 // pred_region
      %55 = dma.done [#allocation3], 1024
    $region25: #{tpu_custom_call.1} parent=1 // pred_fallthru
      _
    // Predicated region
    $region26: #{tpu_custom_call.1} parent=1 // pred_check
      _
    $region27: #{tpu_custom_call.1} parent=1 // pred_check_branch
      %57 = sbr.rel (0) target = $region29
    $region28: #{tpu_custom_call.1} parent=1 // pred_region
      %58 = dma.done [#allocation6], 1024
    $region29: #{tpu_custom_call.1} parent=1 // pred_fallthru
      _
    // Predicated region
    $region30: #{tpu_custom_call.1} parent=1 // pred_check
      _
    $region31: #{tpu_custom_call.1} parent=1 // pred_check_branch
      %60 = sbr.rel (0) target = $region33
    $region32: #{tpu_custom_call.1} parent=1 // pred_region
      %61 = dma.done [#allocation6], 1024
    $region33: #{tpu_custom_call.1} parent=1 // pred_fallthru
      _
    %v63 = vld [vmem:[%s2] sm:$0x1]
    %v64 = vld [vmem:[%s4] sm:$0x1]
    %v65 = vld [vmem:[#allocation2] sm:$0xf]
    %v66 = vld [vmem:[#allocation2 + $0x4] sm:$0xf]
    %v67 = vld [vmem:[#allocation2 + $0x8] sm:$0xf]
    %v68 = vld [vmem:[#allocation2 + $0xc] sm:$0xf]
    %v69 = vld [vmem:[#allocation2 + $0x10] sm:$0xf]
    %v70 = vld [vmem:[#allocation2 + $0x14] sm:$0xf]
    %v71 = vld [vmem:[#allocation2 + $0x18] sm:$0xf]
    %v72 = vld [vmem:[#allocation2 + $0x1c] sm:$0xf]
    %v73 = vld [vmem:[#allocation2 + $0x20] sm:$0xf]
    %v74 = vld [vmem:[#allocation2 + $0x24] sm:$0xf]
    %v75 = vld [vmem:[#allocation2 + $0x28] sm:$0xf]
    %v76 = vld [vmem:[#allocation2 + $0x2c] sm:$0xf]
    %v77 = vld [vmem:[#allocation2 + $0x30] sm:$0xf]
    %v78 = vld [vmem:[#allocation2 + $0x34] sm:$0xf]
    %v79 = vld [vmem:[#allocation2 + $0x38] sm:$0xf]
    %v80 = vld [vmem:[#allocation2 + $0x3c] sm:$0xf]
    %v81 = vld [vmem:[#allocation5] sm:$0xf]
    %v82 = vld [vmem:[#allocation5 + $0x4] sm:$0xf]
    %v83 = vld [vmem:[#allocation5 + $0x8] sm:$0xf]
    %v84 = vld [vmem:[#allocation5 + $0xc] sm:$0xf]
    %v85 = vld [vmem:[#allocation5 + $0x10] sm:$0xf]
    %v86 = vld [vmem:[#allocation5 + $0x14] sm:$0xf]
    %v87 = vld [vmem:[#allocation5 + $0x18] sm:$0xf]
    %v88 = vld [vmem:[#allocation5 + $0x1c] sm:$0xf]
    %v89 = vld [vmem:[#allocation5 + $0x20] sm:$0xf]
    %v90 = vld [vmem:[#allocation5 + $0x24] sm:$0xf]
    %v91 = vld [vmem:[#allocation5 + $0x28] sm:$0xf]
    %v92 = vld [vmem:[#allocation5 + $0x2c] sm:$0xf]
    %v93 = vld [vmem:[#allocation5 + $0x30] sm:$0xf]
    %v94 = vld [vmem:[#allocation5 + $0x34] sm:$0xf]
    %v95 = vld [vmem:[#allocation5 + $0x38] sm:$0xf]
    %v96 = vld [vmem:[#allocation5 + $0x3c] sm:$0xf]
    %v98 = vlaneseq
    %v99 = vshrl.u32 %v98, 7
    %v100 = vsub.s32 0, %v99
    %v101 = vrot.slane %v63, %v100
    %v119 = vunpack.c.l.b16 %v65
    %v120 = vunpack.c.l.b16 %v66
    %v121 = vunpack.c.l.b16 %v67
    %v122 = vunpack.c.l.b16 %v68
    %v123 = vunpack.c.l.b16 %v69
    %v124 = vunpack.c.l.b16 %v70
    %v125 = vunpack.c.l.b16 %v71
    %v126 = vunpack.c.l.b16 %v72
    %v127 = vunpack.c.l.b16 %v73
    %v128 = vunpack.c.l.b16 %v74
    %v129 = vunpack.c.l.b16 %v75
    %v130 = vunpack.c.l.b16 %v76
    %v131 = vunpack.c.l.b16 %v77
    %v132 = vunpack.c.l.b16 %v78
    %v133 = vunpack.c.l.b16 %v79
    %v134 = vunpack.c.l.b16 %v80
    %v135 = vpack.c.b16 %v120, %v119
    %v136 = vpack.c.b16 %v122, %v121
    %v137 = vpack.c.b16 %v124, %v123
    %v138 = vpack.c.b16 %v126, %v125
    %v139 = vpack.c.b16 %v128, %v127
    %v140 = vpack.c.b16 %v130, %v129
    %v141 = vpack.c.b16 %v132, %v131
    %v142 = vpack.c.b16 %v134, %v133
    %v167 = vunpack.c.l.b16 %v81
    %v168 = vunpack.c.l.b16 %v82
    %v169 = vunpack.c.l.b16 %v83
    %v170 = vunpack.c.l.b16 %v84
    %v171 = vunpack.c.l.b16 %v85
    %v172 = vunpack.c.l.b16 %v86
    %v173 = vunpack.c.l.b16 %v87
    %v174 = vunpack.c.l.b16 %v88
    %v175 = vunpack.c.l.b16 %v89
    %v176 = vunpack.c.l.b16 %v90
    %v177 = vunpack.c.l.b16 %v91
    %v178 = vunpack.c.l.b16 %v92
    %v179 = vunpack.c.l.b16 %v93
    %v180 = vunpack.c.l.b16 %v94
    %v181 = vunpack.c.l.b16 %v95
    %v182 = vunpack.c.l.b16 %v96
    %v183 = vpack.c.b16 %v168, %v167
    %v184 = vpack.c.b16 %v170, %v169
    %v185 = vpack.c.b16 %v172, %v171
    %v186 = vpack.c.b16 %v174, %v173
    %v187 = vpack.c.b16 %v176, %v175
    %v188 = vpack.c.b16 %v178, %v177
    %v189 = vpack.c.b16 %v180, %v179
    %v190 = vpack.c.b16 %v182, %v181
    %199 = vmatprep.subr.bf16.mxu0 0
    %200 = vmatpush1.bf16.msra.mxu0 %v183
    %201 = vmatprep.subr.bf16.mxu0 0
    %202 = vmatpush1.bf16.msra.mxu0 %v184
    %203 = vmatprep.subr.bf16.mxu0 0
    %204 = vmatpush1.bf16.msra.mxu0 %v185
    %205 = vmatprep.subr.bf16.mxu0 0
    %206 = vmatpush1.bf16.msra.mxu0 %v186
    %207 = vmatprep.subr.bf16.mxu0 0
    %208 = vmatpush1.bf16.msra.mxu0 %v187
    %209 = vmatprep.subr.bf16.mxu0 0
    %210 = vmatpush1.bf16.msra.mxu0 %v188
    %211 = vmatprep.subr.bf16.mxu0 0
    %212 = vmatpush1.bf16.msra.mxu0 %v189
    %213 = vmatprep.subr.bf16.mxu0 0
    %214 = vmatpush1.bf16.msra.mxu0 %v190
    %215 = vmatprep.subr.bf16.mxu0 0
    %216 = vmatpush1.bf16.msra.mxu0 0
    %217 = vmatprep.subr.bf16.mxu0 0
    %218 = vmatpush1.bf16.msra.mxu0 0
    %219 = vmatprep.subr.bf16.mxu0 0
    %220 = vmatpush1.bf16.msra.mxu0 0
    %221 = vmatprep.subr.bf16.mxu0 0
    %222 = vmatpush1.bf16.msra.mxu0 0
    %223 = vmatprep.subr.bf16.mxu0 0
    %224 = vmatpush1.bf16.msra.mxu0 0
    %225 = vmatprep.subr.bf16.mxu0 0
    %226 = vmatpush1.bf16.msra.mxu0 0
    %227 = vmatprep.subr.bf16.mxu0 0
    %228 = vmatpush1.bf16.msra.mxu0 0
    %229 = vmatprep.subr.bf16.mxu0 0
    %230 = vmatpush1.bf16.msra.mxu0 0
    %231 = vmatprep.mubr.bf16.mxu0 0
    %232 = vmatmul.mubr.bf16.gmra.mrb[0].mxu0 %v135
    %v233 = vpop.f32.mrb[0].mxu0
    %v234 = vadd.f32 %v101, %v233
    %v235 = vpop.f32.mrb[0].mxu0
    %v236 = vpop.f32.mrb[0].mxu0
    %v237 = vadd.f32 %v101, %v236
    %v238 = vpop.f32.mrb[0].mxu0
    %239 = vmatprep.mubr.bf16.mxu0 0
    %240 = vmatmul.mubr.bf16.gmra.mrb[0].mxu0 %v136
    %v241 = vpop.f32.mrb[0].mxu0
    %v242 = vadd.f32 %v101, %v241
    %v243 = vpop.f32.mrb[0].mxu0
    %v244 = vpop.f32.mrb[0].mxu0
    %v245 = vadd.f32 %v101, %v244
    %v246 = vpop.f32.mrb[0].mxu0
    %247 = vmatprep.mubr.bf16.mxu0 0
    %248 = vmatmul.mubr.bf16.gmra.mrb[0].mxu0 %v137
    %v249 = vpop.f32.mrb[0].mxu0
    %v250 = vadd.f32 %v101, %v249
    %v251 = vpop.f32.mrb[0].mxu0
    %v252 = vpop.f32.mrb[0].mxu0
    %v253 = vadd.f32 %v101, %v252
    %v254 = vpop.f32.mrb[0].mxu0
    %255 = vmatprep.mubr.bf16.mxu0 0
    %256 = vmatmul.mubr.bf16.gmra.mrb[0].mxu0 %v138
    %v257 = vpop.f32.mrb[0].mxu0
    %v258 = vadd.f32 %v101, %v257
    %v259 = vpop.f32.mrb[0].mxu0
    %v260 = vpop.f32.mrb[0].mxu0
    %v261 = vadd.f32 %v101, %v260
    %v262 = vpop.f32.mrb[0].mxu0
    %263 = vmatprep.mubr.bf16.mxu0 0
    %264 = vmatmul.mubr.bf16.gmra.mrb[0].mxu0 %v139
    %v265 = vpop.f32.mrb[0].mxu0
    %v266 = vadd.f32 %v101, %v265
    %v267 = vpop.f32.mrb[0].mxu0
    %v268 = vpop.f32.mrb[0].mxu0
    %v269 = vadd.f32 %v101, %v268
    %v270 = vpop.f32.mrb[0].mxu0
    %271 = vmatprep.mubr.bf16.mxu0 0
    %272 = vmatmul.mubr.bf16.gmra.mrb[0].mxu0 %v140
    %v273 = vpop.f32.mrb[0].mxu0
    %v274 = vadd.f32 %v101, %v273
    %v275 = vpop.f32.mrb[0].mxu0
    %v276 = vpop.f32.mrb[0].mxu0
    %v277 = vadd.f32 %v101, %v276
    %v278 = vpop.f32.mrb[0].mxu0
    %279 = vmatprep.mubr.bf16.mxu0 0
    %280 = vmatmul.mubr.bf16.gmra.mrb[0].mxu0 %v141
    %v281 = vpop.f32.mrb[0].mxu0
    %v282 = vadd.f32 %v101, %v281
    %v283 = vpop.f32.mrb[0].mxu0
    %v284 = vpop.f32.mrb[0].mxu0
    %v285 = vadd.f32 %v101, %v284
    %v286 = vpop.f32.mrb[0].mxu0
    %287 = vmatprep.mubr.bf16.mxu0 0
    %288 = vmatmul.mubr.bf16.gmra.mrb[0].mxu0 %v142
    %v289 = vpop.f32.mrb[0].mxu0
    %v290 = vadd.f32 %v101, %v289
    %v291 = vpop.f32.mrb[0].mxu0
    %v292 = vpop.f32.mrb[0].mxu0
    %v293 = vadd.f32 %v101, %v292
    %v294 = vpop.f32.mrb[0].mxu0
    %295 = vdwg.mxu0
    %v296 = vmax.f32 %v234, 0.0
    %v297 = vmax.f32 %v237, 0.0
    %v298 = vmax.f32 %v242, 0.0
    %v299 = vmax.f32 %v245, 0.0
    %v300 = vmax.f32 %v250, 0.0
    %v301 = vmax.f32 %v253, 0.0
    %v302 = vmax.f32 %v258, 0.0
    %v303 = vmax.f32 %v261, 0.0
    %v304 = vmax.f32 %v266, 0.0
    %v305 = vmax.f32 %v269, 0.0
    %v306 = vmax.f32 %v274, 0.0
    %v307 = vmax.f32 %v277, 0.0
    %v308 = vmax.f32 %v282, 0.0
    %v309 = vmax.f32 %v285, 0.0
    %v310 = vmax.f32 %v290, 0.0
    %v311 = vmax.f32 %v293, 0.0
    %v312 = vpack.c.bf16 %v297, %v296
    %v313 = vpack.c.bf16 %v299, %v298
    %v314 = vpack.c.bf16 %v301, %v300
    %v315 = vpack.c.bf16 %v303, %v302
    %v316 = vpack.c.bf16 %v305, %v304
    %v317 = vpack.c.bf16 %v307, %v306
    %v318 = vpack.c.bf16 %v309, %v308
    %v319 = vpack.c.bf16 %v311, %v310
    %v320 = vld [vmem:[#allocation7] sm:$0xf]
    %v321 = vld [vmem:[#allocation7 + $0x4] sm:$0xf]
    %v322 = vld [vmem:[#allocation7 + $0x8] sm:$0xf]
    %v323 = vld [vmem:[#allocation7 + $0xc] sm:$0xf]
    %v324 = vld [vmem:[#allocation7 + $0x10] sm:$0xf]
    %v325 = vld [vmem:[#allocation7 + $0x14] sm:$0xf]
    %v326 = vld [vmem:[#allocation7 + $0x18] sm:$0xf]
    %v327 = vld [vmem:[#allocation7 + $0x1c] sm:$0xf]
    %v328 = vld [vmem:[#allocation7 + $0x20] sm:$0xf]
    %v329 = vld [vmem:[#allocation7 + $0x24] sm:$0xf]
    %v330 = vld [vmem:[#allocation7 + $0x28] sm:$0xf]
    %v331 = vld [vmem:[#allocation7 + $0x2c] sm:$0xf]
    %v332 = vld [vmem:[#allocation7 + $0x30] sm:$0xf]
    %v333 = vld [vmem:[#allocation7 + $0x34] sm:$0xf]
    %v334 = vld [vmem:[#allocation7 + $0x38] sm:$0xf]
    %v335 = vld [vmem:[#allocation7 + $0x3c] sm:$0xf]
    %v337 = vlaneseq
    %v338 = vshrl.u32 %v337, 7
    %v339 = vsub.s32 0, %v338
    %v340 = vrot.slane %v64, %v339
    %v358 = vunpack.c.l.b16 %v320
    %v359 = vunpack.c.l.b16 %v321
    %v360 = vunpack.c.l.b16 %v322
    %v361 = vunpack.c.l.b16 %v323
    %v362 = vunpack.c.l.b16 %v324
    %v363 = vunpack.c.l.b16 %v325
    %v364 = vunpack.c.l.b16 %v326
    %v365 = vunpack.c.l.b16 %v327
    %v366 = vunpack.c.l.b16 %v328
    %v367 = vunpack.c.l.b16 %v329
    %v368 = vunpack.c.l.b16 %v330
    %v369 = vunpack.c.l.b16 %v331
    %v370 = vunpack.c.l.b16 %v332
    %v371 = vunpack.c.l.b16 %v333
    %v372 = vunpack.c.l.b16 %v334
    %v373 = vunpack.c.l.b16 %v335
    %v374 = vpack.c.b16 %v359, %v358
    %v375 = vpack.c.b16 %v361, %v360
    %v376 = vpack.c.b16 %v363, %v362
    %v377 = vpack.c.b16 %v365, %v364
    %v378 = vpack.c.b16 %v367, %v366
    %v379 = vpack.c.b16 %v369, %v368
    %v380 = vpack.c.b16 %v371, %v370
    %v381 = vpack.c.b16 %v373, %v372
    %390 = vmatprep.subr.bf16.mxu0 0
    %391 = vmatpush1.bf16.msra.mxu0 %v374
    %392 = vmatprep.subr.bf16.mxu0 0
    %393 = vmatpush1.bf16.msra.mxu0 %v375
    %394 = vmatprep.subr.bf16.mxu0 0
    %395 = vmatpush1.bf16.msra.mxu0 %v376
    %396 = vmatprep.subr.bf16.mxu0 0
    %397 = vmatpush1.bf16.msra.mxu0 %v377
    %398 = vmatprep.subr.bf16.mxu0 0
    %399 = vmatpush1.bf16.msra.mxu0 %v378
    %400 = vmatprep.subr.bf16.mxu0 0
    %401 = vmatpush1.bf16.msra.mxu0 %v379
    %402 = vmatprep.subr.bf16.mxu0 0
    %403 = vmatpush1.bf16.msra.mxu0 %v380
    %404 = vmatprep.subr.bf16.mxu0 0
    %405 = vmatpush1.bf16.msra.mxu0 %v381
    %406 = vmatprep.subr.bf16.mxu0 0
    %407 = vmatpush1.bf16.msra.mxu0 0
    %408 = vmatprep.subr.bf16.mxu0 0
    %409 = vmatpush1.bf16.msra.mxu0 0
    %410 = vmatprep.subr.bf16.mxu0 0
    %411 = vmatpush1.bf16.msra.mxu0 0
    %412 = vmatprep.subr.bf16.mxu0 0
    %413 = vmatpush1.bf16.msra.mxu0 0
    %414 = vmatprep.subr.bf16.mxu0 0
    %415 = vmatpush1.bf16.msra.mxu0 0
    %416 = vmatprep.subr.bf16.mxu0 0
    %417 = vmatpush1.bf16.msra.mxu0 0
    %418 = vmatprep.subr.bf16.mxu0 0
    %419 = vmatpush1.bf16.msra.mxu0 0
    %420 = vmatprep.subr.bf16.mxu0 0
    %421 = vmatpush1.bf16.msra.mxu0 0
    %422 = vmatprep.mubr.bf16.mxu0 0
    %423 = vmatmul.mubr.bf16.gmra.mrb[0].mxu0 %v312
    %v424 = vpop.f32.mrb[0].mxu0
    %v425 = vadd.f32 %v340, %v424
    %v426 = vpop.f32.mrb[0].mxu0
    %v427 = vpop.f32.mrb[0].mxu0
    %v428 = vadd.f32 %v340, %v427
    %v429 = vpop.f32.mrb[0].mxu0
    %430 = vmatprep.mubr.bf16.mxu0 0
    %431 = vmatmul.mubr.bf16.gmra.mrb[0].mxu0 %v313
    %v432 = vpop.f32.mrb[0].mxu0
    %v433 = vadd.f32 %v340, %v432
    %v434 = vpop.f32.mrb[0].mxu0
    %v435 = vpop.f32.mrb[0].mxu0
    %v436 = vadd.f32 %v340, %v435
    %v437 = vpop.f32.mrb[0].mxu0
    %438 = vmatprep.mubr.bf16.mxu0 0
    %439 = vmatmul.mubr.bf16.gmra.mrb[0].mxu0 %v314
    %v440 = vpop.f32.mrb[0].mxu0
    %v441 = vadd.f32 %v340, %v440
    %v442 = vpop.f32.mrb[0].mxu0
    %v443 = vpop.f32.mrb[0].mxu0
    %v444 = vadd.f32 %v340, %v443
    %v445 = vpop.f32.mrb[0].mxu0
    %446 = vmatprep.mubr.bf16.mxu0 0
    %447 = vmatmul.mubr.bf16.gmra.mrb[0].mxu0 %v315
    %v448 = vpop.f32.mrb[0].mxu0
    %v449 = vadd.f32 %v340, %v448
    %v450 = vpop.f32.mrb[0].mxu0
    %v451 = vpop.f32.mrb[0].mxu0
    %v452 = vadd.f32 %v340, %v451
    %v453 = vpop.f32.mrb[0].mxu0
    %454 = vmatprep.mubr.bf16.mxu0 0
    %455 = vmatmul.mubr.bf16.gmra.mrb[0].mxu0 %v316
    %v456 = vpop.f32.mrb[0].mxu0
    %v457 = vadd.f32 %v340, %v456
    %v458 = vpop.f32.mrb[0].mxu0
    %v459 = vpop.f32.mrb[0].mxu0
    %v460 = vadd.f32 %v340, %v459
    %v461 = vpop.f32.mrb[0].mxu0
    %462 = vmatprep.mubr.bf16.mxu0 0
    %463 = vmatmul.mubr.bf16.gmra.mrb[0].mxu0 %v317
    %v464 = vpop.f32.mrb[0].mxu0
    %v465 = vadd.f32 %v340, %v464
    %v466 = vpop.f32.mrb[0].mxu0
    %v467 = vpop.f32.mrb[0].mxu0
    %v468 = vadd.f32 %v340, %v467
    %v469 = vpop.f32.mrb[0].mxu0
    %470 = vmatprep.mubr.bf16.mxu0 0
    %471 = vmatmul.mubr.bf16.gmra.mrb[0].mxu0 %v318
    %v472 = vpop.f32.mrb[0].mxu0
    %v473 = vadd.f32 %v340, %v472
    %v474 = vpop.f32.mrb[0].mxu0
    %v475 = vpop.f32.mrb[0].mxu0
    %v476 = vadd.f32 %v340, %v475
    %v477 = vpop.f32.mrb[0].mxu0
    %478 = vmatprep.mubr.bf16.mxu0 0
    %479 = vmatmul.mubr.bf16.gmra.mrb[0].mxu0 %v319
    %v480 = vpop.f32.mrb[0].mxu0
    %v481 = vadd.f32 %v340, %v480
    %v482 = vpop.f32.mrb[0].mxu0
    %v483 = vpop.f32.mrb[0].mxu0
    %v484 = vadd.f32 %v340, %v483
    %v485 = vpop.f32.mrb[0].mxu0
    %486 = vdwg.mxu0
    %v487 = vmax.f32 %v425, 0.0
    %v488 = vmax.f32 %v428, 0.0
    %v489 = vmax.f32 %v433, 0.0
    %v490 = vmax.f32 %v436, 0.0
    %v491 = vmax.f32 %v441, 0.0
    %v492 = vmax.f32 %v444, 0.0
    %v493 = vmax.f32 %v449, 0.0
    %v494 = vmax.f32 %v452, 0.0
    %v495 = vmax.f32 %v457, 0.0
    %v496 = vmax.f32 %v460, 0.0
    %v497 = vmax.f32 %v465, 0.0
    %v498 = vmax.f32 %v468, 0.0
    %v499 = vmax.f32 %v473, 0.0
    %v500 = vmax.f32 %v476, 0.0
    %v501 = vmax.f32 %v481, 0.0
    %v502 = vmax.f32 %v484, 0.0
    %503 = vst [vmem:[#allocation8] sm:$0xff] %v487
    %504 = vst [vmem:[#allocation8 + $0x8] sm:$0xff] %v488
    %505 = vst [vmem:[#allocation8 + $0x10] sm:$0xff] %v489
    %506 = vst [vmem:[#allocation8 + $0x18] sm:$0xff] %v490
    %507 = vst [vmem:[#allocation8 + $0x20] sm:$0xff] %v491
    %508 = vst [vmem:[#allocation8 + $0x28] sm:$0xff] %v492
    %509 = vst [vmem:[#allocation8 + $0x30] sm:$0xff] %v493
    %510 = vst [vmem:[#allocation8 + $0x38] sm:$0xff] %v494
    %511 = vst [vmem:[#allocation8 + $0x40] sm:$0xff] %v495
    %512 = vst [vmem:[#allocation8 + $0x48] sm:$0xff] %v496
    %513 = vst [vmem:[#allocation8 + $0x50] sm:$0xff] %v497
    %514 = vst [vmem:[#allocation8 + $0x58] sm:$0xff] %v498
    %515 = vst [vmem:[#allocation8 + $0x60] sm:$0xff] %v499
    %516 = vst [vmem:[#allocation8 + $0x68] sm:$0xff] %v500
    %517 = vst [vmem:[#allocation8 + $0x70] sm:$0xff] %v501
    %518 = vst [vmem:[#allocation8 + $0x78] sm:$0xff] %v502
    // Predicated region
    $region34: #{tpu_custom_call.1} parent=1 // pred_check
      _
    $region35: #{tpu_custom_call.1} parent=1 // pred_check_branch
      %520 = sbr.rel (0) target = $region37
    $region36: #{tpu_custom_call.1} parent=1 // pred_region
      %s522 = ssub.s32 2048, 2048
      %523 = vsyncadd [#allocation4], %s522
      %s524 = sshll.u32 [#allocation8], 4
      %s525 = int_to_ptr.vmem [resolvable:$true] %s524
      %530 = dma.vmem_to_hbm [thread:$0]  %s525, 2048, %s5, [#allocation4], 128, 128, 8
    $region37: #{tpu_custom_call.1} parent=1 // pred_fallthru
      _
    // Predicated region
    $region38: #{tpu_custom_call.1} parent=1 // pred_check
      _
    $region39: #{tpu_custom_call.1} parent=1 // pred_check_branch
      %532 = sbr.rel (0) target = $region41
    $region40: #{tpu_custom_call.1} parent=1 // pred_region
      %533 = dma.done [#allocation4], 2048
    $region41: #{tpu_custom_call.1} parent=1 // pred_fallthru
      _
    %534 = vsyncpa [#allocation3], 1
    %535 = vsyncpa [#allocation6], 1
    %536 = vsyncpa [#allocation4], 1

</llo_original>
